<compile_context>
chip_gen: v6e
topology: v6e:2x2x1
jax: 0.10.0
libtpu: 0.0.40
codegen_flags: <defaults>
</compile_context>

<pallas_src>
import functools

import jax
import jax.numpy as jnp
import numpy as np
from jax.experimental import pallas as pl
from jax.experimental.pallas import tpu as pltpu


# ------------------------------- Pallas kernel ------------------------------ #

def _deltas_kernel(x_ref, o_ref, *, n, t, f, inv_denom):
    """x_ref / o_ref: (tile_b, t*f) time-major flattened rows."""
    x = x_ref[...].astype(jnp.float32)                     # (tile_b, t*f)

    def frame(i):
        # time frame i with replicate ("edge") clamping, shape (tile_b, f)
        i = min(max(i, 0), t - 1)
        return x[:, i * f:(i + 1) * f]

    def edge_delta(tt):
        # single boundary output frame tt
        acc = frame(tt + 1) - frame(tt - 1)
        for j in range(2, n + 1):
            acc = acc + float(j) * (frame(tt + j) - frame(tt - j))
        return acc

    pieces = [edge_delta(tt) for tt in range(min(n, t))]

    m = t - 2 * n                                          # interior frames [n, t-n)
    if m > 0:
        acc = (x[:, (n + 1) * f:(n + 1 + m) * f]
               - x[:, (n - 1) * f:(n - 1 + m) * f])
        for j in range(2, n + 1):
            acc = acc + float(j) * (x[:, (n + j) * f:(n + j + m) * f]
                                    - x[:, (n - j) * f:(n - j + m) * f])
        pieces.append(acc)

    pieces += [edge_delta(tt) for tt in range(max(t - n, n), t)]

    full = pieces[0] if len(pieces) == 1 else jnp.concatenate(pieces, axis=1)
    o_ref[...] = (full * inv_denom).astype(o_ref.dtype)    # one lane-dense store


# ------------------------------ Pallas wrapper ------------------------------ #

def _pick_tile_b(batch, row_f32_bytes, budget_bytes=2 << 20):
    """Batch tile that is a multiple of 8 (or the full batch) and keeps the
    per-block f32 working set around `budget_bytes`."""
    if batch <= 8:
        return batch
    tb = 8
    while tb * 2 <= batch and (tb * 2) * row_f32_bytes <= budget_bytes:
        tb *= 2
    return tb


def deltas_pallas(x, *, n, denom):
    if n < 1:
        raise ValueError("window_length must be >= 3")
    if x.ndim not in (3, 4):
        raise ValueError("expected [B, T, F] or [B, T, F, C] input")

    orig_shape = x.shape
    B, T = x.shape[0], x.shape[1]
    fc = int(np.prod(x.shape[2:]))
    x2 = x.reshape(B, T * fc)                              # free reshape (row-major)

    row_f32_bytes = T * fc * 4
    tile_b = _pick_tile_b(B, row_f32_bytes)
    grid = (pl.cdiv(B, tile_b),)

    # double-buffered in/out blocks + shifted-slice / concat temporaries
    vmem_need = 12 * tile_b * row_f32_bytes
    vmem_limit = int(min(max(vmem_need, 32 * 1024 * 1024), 64 * 1024 * 1024))

    kernel = functools.partial(_deltas_kernel, n=n, t=T, f=fc,
                               inv_denom=float(1.0 / denom))
    out2 = pl.pallas_call(
        kernel,
        out_shape=jax.ShapeDtypeStruct((B, T * fc), x.dtype),
        grid=grid,
        in_specs=[pl.BlockSpec((tile_b, T * fc), lambda i: (i, 0))],
        out_specs=pl.BlockSpec((tile_b, T * fc), lambda i: (i, 0)),
        compiler_params=pltpu.CompilerParams(
            dimension_semantics=("parallel",),
            vmem_limit_bytes=vmem_limit),
    )(x2)
    return out2.reshape(orig_shape)


# ------------------------------- module port -------------------------------- #

class Deltas:
    """JAX/Pallas port of speechbrain Deltas (delta / time-derivative features)."""

    def __init__(self, input_size, window_length=5):
        del input_size  # the conv kernel is the fixed ramp arange(-n..n); no params
        self.n = (window_length - 1) // 2
        if self.n < 1:
            raise ValueError("window_length must be >= 3")
        self.denom = self.n * (self.n + 1) * (2 * self.n + 1) / 3

    def __call__(self, x):
        return deltas_pallas(x, n=self.n, denom=self.denom)


# --------------------------------- reference -------------------------------- #

def _ref_deltas(x, n, denom):
    orig_shape = x.shape
    B, T = x.shape[0], x.shape[1]
    fc = int(np.prod(x.shape[2:]))
    xf = x.reshape(B, T, fc).astype(jnp.float32)
    xp = jnp.pad(xf, ((0, 0), (n, n), (0, 0)), mode="edge")
    out = jnp.zeros((B, T, fc), jnp.float32)
    for k in range(2 * n + 1):                 # conv1d is cross-correlation
        out = out + float(k - n) * xp[:, k:k + T, :]
    return (out / denom).reshape(orig_shape).astype(x.dtype)


if __name__ == "__main__":
    key = jax.random.PRNGKey(0)
    k1, k2 = jax.random.split(key)

    # 3-D [batch, time, features] — the documented usage.
    B, T, F = 2, 16, 20
    x3 = jax.random.normal(k1, (B, T, F), dtype=jnp.float32)
    d3 = Deltas(input_size=F)
    y3 = jax.block_until_ready(d3(x3))
    np.testing.assert_allclose(np.asarray(y3),
                               np.asarray(_ref_deltas(x3, d3.n, d3.denom)),
                               rtol=1e-5, atol=1e-5)

    # 4-D [batch, time, features, channels].
    B4, T4, F4, C4 = 2, 12, 8, 3
    x4 = jax.random.normal(k2, (B4, T4, F4, C4), dtype=jnp.float32)
    d4 = Deltas(input_size=F4)
    y4 = jax.block_until_ready(d4(x4))
    np.testing.assert_allclose(np.asarray(y4),
                               np.asarray(_ref_deltas(x4, d4.n, d4.denom)),
                               rtol=1e-5, atol=1e-5)

    print("KERNEL_OK")
</pallas_src>

<mosaic_0001>
module attributes {stable_mosaic.version = 11 : i64} {
  func.func @_deltas_kernel(%arg0: i32, %arg1: memref<2x320xf32, #tpu.memory_space<vmem>>, %arg2: memref<2x320xf32, #tpu.memory_space<vmem>>) attributes {dimension_semantics = [#tpu.dimension_semantics<parallel>], iteration_bounds = array<i64: 1>, scalar_prefetch = 0 : i64, scratch_operands = 0 : i64, tpu.core_type = #tpu.core_type<tc>, window_params = [{transform_indices = @transform_0, window_bounds = array<i64: 2, 320>}, {transform_indices = @transform_1, window_bounds = array<i64: 2, 320>}]} {
    %c0 = arith.constant 0 : index
    %c0_0 = arith.constant 0 : index
    %0 = vector.load %arg1[%c0, %c0_0] : memref<2x320xf32, #tpu.memory_space<vmem>>, vector<2x320xf32>
    %1 = vector.extract_strided_slice %0 {offsets = [0, 20], sizes = [2, 20], strides = [1, 1]} : vector<2x320xf32> to vector<2x20xf32>
    %2 = vector.extract_strided_slice %0 {offsets = [0, 0], sizes = [2, 20], strides = [1, 1]} : vector<2x320xf32> to vector<2x20xf32>
    %3 = arith.subf %1, %2 : vector<2x20xf32>
    %4 = vector.extract_strided_slice %0 {offsets = [0, 40], sizes = [2, 20], strides = [1, 1]} : vector<2x320xf32> to vector<2x20xf32>
    %5 = vector.extract_strided_slice %0 {offsets = [0, 0], sizes = [2, 20], strides = [1, 1]} : vector<2x320xf32> to vector<2x20xf32>
    %6 = arith.subf %4, %5 : vector<2x20xf32>
    %cst = arith.constant 2.000000e+00 : f32
    %7 = vector.broadcast %cst : f32 to vector<2x20xf32>
    %8 = arith.mulf %7, %6 : vector<2x20xf32>
    %9 = arith.addf %3, %8 : vector<2x20xf32>
    %10 = vector.extract_strided_slice %0 {offsets = [0, 40], sizes = [2, 20], strides = [1, 1]} : vector<2x320xf32> to vector<2x20xf32>
    %11 = vector.extract_strided_slice %0 {offsets = [0, 0], sizes = [2, 20], strides = [1, 1]} : vector<2x320xf32> to vector<2x20xf32>
    %12 = arith.subf %10, %11 : vector<2x20xf32>
    %13 = vector.extract_strided_slice %0 {offsets = [0, 60], sizes = [2, 20], strides = [1, 1]} : vector<2x320xf32> to vector<2x20xf32>
    %14 = vector.extract_strided_slice %0 {offsets = [0, 0], sizes = [2, 20], strides = [1, 1]} : vector<2x320xf32> to vector<2x20xf32>
    %15 = arith.subf %13, %14 : vector<2x20xf32>
    %cst_1 = arith.constant 2.000000e+00 : f32
    %16 = vector.broadcast %cst_1 : f32 to vector<2x20xf32>
    %17 = arith.mulf %16, %15 : vector<2x20xf32>
    %18 = arith.addf %12, %17 : vector<2x20xf32>
    %19 = vector.extract_strided_slice %0 {offsets = [0, 60], sizes = [2, 240], strides = [1, 1]} : vector<2x320xf32> to vector<2x240xf32>
    %20 = vector.extract_strided_slice %0 {offsets = [0, 20], sizes = [2, 240], strides = [1, 1]} : vector<2x320xf32> to vector<2x240xf32>
    %21 = arith.subf %19, %20 : vector<2x240xf32>
    %22 = vector.extract_strided_slice %0 {offsets = [0, 80], sizes = [2, 240], strides = [1, 1]} : vector<2x320xf32> to vector<2x240xf32>
    %23 = vector.extract_strided_slice %0 {offsets = [0, 0], sizes = [2, 240], strides = [1, 1]} : vector<2x320xf32> to vector<2x240xf32>
    %24 = arith.subf %22, %23 : vector<2x240xf32>
    %cst_2 = arith.constant 2.000000e+00 : f32
    %25 = vector.broadcast %cst_2 : f32 to vector<2x240xf32>
    %26 = arith.mulf %25, %24 : vector<2x240xf32>
    %27 = arith.addf %21, %26 : vector<2x240xf32>
    %28 = vector.extract_strided_slice %0 {offsets = [0, 300], sizes = [2, 20], strides = [1, 1]} : vector<2x320xf32> to vector<2x20xf32>
    %29 = vector.extract_strided_slice %0 {offsets = [0, 260], sizes = [2, 20], strides = [1, 1]} : vector<2x320xf32> to vector<2x20xf32>
    %30 = arith.subf %28, %29 : vector<2x20xf32>
    %31 = vector.extract_strided_slice %0 {offsets = [0, 300], sizes = [2, 20], strides = [1, 1]} : vector<2x320xf32> to vector<2x20xf32>
    %32 = vector.extract_strided_slice %0 {offsets = [0, 240], sizes = [2, 20], strides = [1, 1]} : vector<2x320xf32> to vector<2x20xf32>
    %33 = arith.subf %31, %32 : vector<2x20xf32>
    %cst_3 = arith.constant 2.000000e+00 : f32
    %34 = vector.broadcast %cst_3 : f32 to vector<2x20xf32>
    %35 = arith.mulf %34, %33 : vector<2x20xf32>
    %36 = arith.addf %30, %35 : vector<2x20xf32>
    %37 = vector.extract_strided_slice %0 {offsets = [0, 300], sizes = [2, 20], strides = [1, 1]} : vector<2x320xf32> to vector<2x20xf32>
    %38 = vector.extract_strided_slice %0 {offsets = [0, 280], sizes = [2, 20], strides = [1, 1]} : vector<2x320xf32> to vector<2x20xf32>
    %39 = arith.subf %37, %38 : vector<2x20xf32>
    %40 = vector.extract_strided_slice %0 {offsets = [0, 300], sizes = [2, 20], strides = [1, 1]} : vector<2x320xf32> to vector<2x20xf32>
    %41 = vector.extract_strided_slice %0 {offsets = [0, 260], sizes = [2, 20], strides = [1, 1]} : vector<2x320xf32> to vector<2x20xf32>
    %42 = arith.subf %40, %41 : vector<2x20xf32>
    %cst_4 = arith.constant 2.000000e+00 : f32
    %43 = vector.broadcast %cst_4 : f32 to vector<2x20xf32>
    %44 = arith.mulf %43, %42 : vector<2x20xf32>
    %45 = arith.addf %39, %44 : vector<2x20xf32>
    %46 = tpu.concatenate %9, %18, %27, %36, %45 in 1 : vector<2x20xf32>, vector<2x20xf32>, vector<2x240xf32>, vector<2x20xf32>, vector<2x20xf32> -> vector<2x320xf32>
    %cst_5 = arith.constant 1.000000e-01 : f32
    %47 = vector.broadcast %cst_5 : f32 to vector<2x320xf32>
    %48 = arith.mulf %46, %47 : vector<2x320xf32>
    %c0_6 = arith.constant 0 : index
    %c0_7 = arith.constant 0 : index
    %49 = vector.load %arg2[%c0_6, %c0_7] : memref<2x320xf32, #tpu.memory_space<vmem>>, vector<2x320xf32>
    tpu.vector_store %arg2[%c0_6, %c0_7], %48 {strides = array<i32>} : memref<2x320xf32, #tpu.memory_space<vmem>>, vector<2x320xf32>,
    return
  }
  func.func @transform_0(%arg0: i32) -> (i32, i32) {
    %c0_i32 = arith.constant 0 : i32
    %c0_i32_0 = arith.constant 0 : i32
    return %arg0, %c0_i32 : i32, i32
  }
  func.func @transform_1(%arg0: i32) -> (i32, i32) {
    %c0_i32 = arith.constant 0 : i32
    %c0_i32_0 = arith.constant 0 : i32
    return %arg0, %c0_i32 : i32, i32
  }
}

</mosaic_0001>

<llo_original>
// kernel: tpu_custom_call.1
$region0: #{tpu_custom_call.1}
  #allocation0 [shape = 'u32[]', space=smem, size = 0x4, offset = 0x4, fixed_abs, tag = 'smem constant byte address 0x4 - core index']
  #allocation1 [shape = 'u32[144,128]{1,0:T(1,128)}', space=vmem, size = 0x12000, scoped, tag = 'internal scratch']
  %s0 = inlined_call_operand.hbm [shape: f32[2,320], index: 0, kind: input, shape index: {}]
  %s1 = inlined_call_operand.hbm [shape: f32[2,320], index: 1, kind: output, shape index: {}]
  %s2 = sld [smem:[#allocation0]]
  $region18: #{tpu_custom_call.1} parent=0
    _
  %s4 = ssub.s32 1, %s2
  %s5 = scalar_select 0, %s4, %s2
  $region1: #{tpu_custom_call.1} parent=0
    #allocation2 [shape = 'u8[3072]{0}', space=vmem, size = 0xc00, scoped, tag = 'input window, operand 0, single buffered']
    #allocation3 [shape = 's32[1]{0}', space=sflag, size = 0x4, scoped, tag = 'scoped memory for tpu_custom_call.1']
    #allocation4 [shape = 's32[1]{0}', space=sflag, size = 0x4, scoped, tag = 'scoped memory for tpu_custom_call.1']
    #allocation5 [shape = 'u8[3072]{0}', space=vmem, size = 0xc00, scoped, tag = 'output window, operand 0, single buffered']
    %6 = vsyncpa [#allocation3], 0
    %7 = vsyncpa [#allocation4], 0
    // Predicated region
    $region2: #{tpu_custom_call.1} parent=1 // pred_check
      _
    $region3: #{tpu_custom_call.1} parent=1 // pred_check_branch
      %9 = sbr.rel (0) target = $region5
    $region4: #{tpu_custom_call.1} parent=1 // pred_region
      %s11 = ssub.s32 96, 96
      %12 = vsyncadd [#allocation3], %s11
      %s14 = sshll.u32 [#allocation2], 4
      %s15 = int_to_ptr.vmem [resolvable:$true] %s14
      %17 = dma.hbm_to_vmem [thread:$0]  %s0, 96, %s15, [#allocation3]
    $region5: #{tpu_custom_call.1} parent=1 // pred_fallthru
      _
    // Predicated region
    $region6: #{tpu_custom_call.1} parent=1 // pred_check
      _
    $region7: #{tpu_custom_call.1} parent=1 // pred_check_branch
      %19 = sbr.rel (0) target = $region9
    $region8: #{tpu_custom_call.1} parent=1 // pred_region
      %20 = dma.done [#allocation3], 96
    $region9: #{tpu_custom_call.1} parent=1 // pred_fallthru
      _
    %v21 = vld [vmem:[#allocation2] sm:$0x3f]
    %23 = vrot.lane.b32.xlu0 %v21, 20
    %v24 = vpop.permute.xlu0 %23
    %v26 = vsub.f32 %v21, %v24
    %27 = vrot.lane.b32.xlu0 %v21, 40
    %v28 = vpop.permute.xlu0 %27
    %v30 = vsub.f32 %v21, %v28
    %v31 = vmul.f32 %v30, 2.0
    %33 = vrot.lane.b32.xlu0 %v31, 108
    %v34 = vpop.permute.xlu0 %33
    %v36 = vadd.f32 %v26, %v34
    %37 = vrot.lane.b32.xlu0 %v21, 60
    %v38 = vpop.permute.xlu0 %37
    %v40 = vsub.f32 %v21, %v38
    %v41 = vmul.f32 %v40, 2.0
    %43 = vrot.lane.b32.xlu0 %v41, 108
    %v44 = vpop.permute.xlu0 %43
    %v46 = vadd.f32 %v30, %v44
    %v47 = vrot.slane %v28, 6
    %vm48 = vcmask 326656
    %v49 = vsel %vm48, %v47, %v28
    %v51 = vsub.f32 %v21, %v49
    %52 = vrot.lane.b32.xlu0 %v21, 80
    %v53 = vpop.permute.xlu0 %52
    %v54 = vrot.slane %v53, 6
    %vm55 = vcmask 654336
    %v56 = vsel %vm55, %v54, %v53
    %v58 = vsub.f32 %v21, %v56
    %v59 = vmul.f32 %v58, 2.0
    %61 = vrot.lane.b32.xlu0 %v59, 108
    %v62 = vpop.permute.xlu0 %61
    %v63 = vrot.slane %v62, 2
    %vm64 = vcmask 883712
    %v65 = vsel %vm64, %v62, %v63
    %v67 = vadd.f32 %v51, %v65
    %68 = vrot.lane.b32.xlu0 %v21, 84
    %v69 = vpop.permute.xlu0 %68
    %v70 = vrot.slane %v69, 4
    %72 = vrot.lane.b32.xlu0 %v21, 124
    %v73 = vpop.permute.xlu0 %72
    %v74 = vrot.slane %v73, 4
    %v76 = vsub.f32 %v70, %v74
    %77 = vrot.lane.b32.xlu0 %v21, 16
    %v78 = vpop.permute.xlu0 %77
    %v79 = vrot.slane %v78, 2
    %v80 = vrot.slane %v78, 4
    %vm81 = vcmask 130048
    %v82 = vsel %vm81, %v79, %v80
    %v84 = vsub.f32 %v70, %v82
    %v85 = vmul.f32 %v84, 2.0
    %v86 = vadd.f32 %v76, %v85
    %87 = vrot.lane.b32.xlu0 %v21, 104
    %v88 = vpop.permute.xlu0 %87
    %v89 = vrot.slane %v88, 4
    %v91 = vsub.f32 %v70, %v89
    %v92 = vmul.f32 %v76, 2.0
    %v93 = vadd.f32 %v91, %v92
    %v96 = vunpack.c.l.s4 1983009808
    %v97 = vunpack.c.0.s8 %v96
    %v98 = vlaneseq
    %v99 = vshrl.u32 %v98, 7
    %v100 = vsub.s32 %v97, %v99
    %v101 = vrot.slane %v36, %v100
    %102 = vrot.lane.b32.xlu0 %v101, 108
    %v103 = vpop.permute.xlu0 %102
    %v107 = vunpack.c.l.s4 1983009808
    %v108 = vunpack.c.0.s8 %v107
    %v109 = vlaneseq
    %v110 = vshrl.u32 %v109, 7
    %v111 = vsub.s32 %v108, %v110
    %v112 = vrot.slane %v46, %v111
    %113 = vrot.lane.b32.xlu0 %v112, 108
    %v114 = vpop.permute.xlu0 %113
    %v117 = vcombine.high %v67, %v67
    %v119 = vunpack.c.l.s4 1983009808
    %v120 = vunpack.c.0.s8 %v119
    %v121 = vlaneseq
    %v122 = vshrl.u32 %v121, 7
    %v123 = vsub.s32 %v120, %v122
    %v124 = vrot.slane %v67, %v123
    %v126 = vunpack.c.l.s4 1983009808
    %v127 = vunpack.c.0.s8 %v126
    %v128 = vlaneseq
    %v129 = vshrl.u32 %v128, 7
    %v130 = vsub.s32 %v127, %v129
    %v131 = vrot.slane %v117, %v130
    %v132 = vcombine.high %v124, %v124
    %133 = vrot.lane.b32.xlu0 %v124, 108
    %v134 = vpop.permute.xlu0 %133
    %135 = vrot.lane.b32.xlu0 %v132, 108
    %v136 = vpop.permute.xlu0 %135
    %137 = vrot.lane.b32.xlu0 %v131, 108
    %v138 = vpop.permute.xlu0 %137
    %v139 = vsel %vm64, %v134, %v136
    %v140 = vsel %vm64, %v136, %v138
    %v146 = vunpack.c.l.s4 1983009808
    %v147 = vunpack.c.0.s8 %v146
    %v148 = vlaneseq
    %v149 = vshrl.u32 %v148, 7
    %v150 = vsub.s32 %v147, %v149
    %v151 = vrot.slane %v86, %v150
    %152 = vrot.lane.b32.xlu0 %v151, 24
    %v153 = vpop.permute.xlu0 %152
    %v157 = vunpack.c.l.s4 1983009808
    %v158 = vunpack.c.0.s8 %v157
    %v159 = vlaneseq
    %v160 = vshrl.u32 %v159, 7
    %v161 = vsub.s32 %v158, %v160
    %v162 = vrot.slane %v93, %v161
    %163 = vrot.lane.b32.xlu0 %v162, 44
    %v164 = vpop.permute.xlu0 %163
    %vm166 = vcmask 162816
    %v167 = vsel %vm166, %v103, %v114
    %v168 = vsel %vm48, %v167, %v139
    %vm169 = vcmask 195584
    %v170 = vsel %vm169, %v138, %v153
    %vm171 = vcmask 359424
    %v172 = vsel %vm171, %v170, %v164
    %v173 = vmul.f32 %v168, 0.1
    %v174 = vmul.f32 %v140, 0.1
    %v175 = vmul.f32 %v172, 0.1
    %v179 = vcombine.low %v173, %v174
    %v181 = vunpack.c.l.s4 1983009808
    %v182 = vunpack.c.0.s8 %v181
    %v183 = vlaneseq
    %v184 = vshrl.u32 %v183, 7
    %v185 = vsub.s32 %v182, %v184
    %v186 = vrot.slane %v179, %v185
    %v188 = vunpack.c.l.s4 1983009808
    %v189 = vunpack.c.0.s8 %v188
    %v190 = vlaneseq
    %v191 = vshrl.u32 %v190, 7
    %v192 = vsub.s32 %v189, %v191
    %v193 = vrot.slane %v175, %v192
    %v194 = vcombine.low %v186, %v193
    %vm196 = vcmask 1041408
    %vm197 = vcmask 1043458
    %vm198 = vmor %vm197, %vm196
    %vm199 = vcmask 521220
    %vm200 = vmor %vm199, %vm198
    %201 = vst.msk [vmem:[#allocation5] sm:$0x3f] %vm200, %v194
    // Predicated region
    $region10: #{tpu_custom_call.1} parent=1 // pred_check
      _
    $region11: #{tpu_custom_call.1} parent=1 // pred_check_branch
      %203 = sbr.rel (0) target = $region13
    $region12: #{tpu_custom_call.1} parent=1 // pred_region
      %s205 = ssub.s32 96, 96
      %206 = vsyncadd [#allocation4], %s205
      %s208 = sshll.u32 [#allocation5], 4
      %s209 = int_to_ptr.vmem [resolvable:$true] %s208
      %211 = dma.vmem_to_hbm [thread:$0]  %s209, 96, %s1, [#allocation4]
    $region13: #{tpu_custom_call.1} parent=1 // pred_fallthru
      _
    // Predicated region
    $region14: #{tpu_custom_call.1} parent=1 // pred_check
      _
    $region15: #{tpu_custom_call.1} parent=1 // pred_check_branch
      %213 = sbr.rel (0) target = $region17
    $region16: #{tpu_custom_call.1} parent=1 // pred_region
      %214 = dma.done [#allocation4], 96
    $region17: #{tpu_custom_call.1} parent=1 // pred_fallthru
      _
    %215 = vsyncpa [#allocation3], 1
    %216 = vsyncpa [#allocation4], 1

</llo_original>
